<compile_context>
chip_gen: v7x
topology: tpu7x:2x2x1
jax: 0.10.0
libtpu: 0.0.40
codegen_flags: <defaults>
</compile_context>

<pallas_src>
import jax
import jax.numpy as jnp
from jax.experimental import pallas as pl
from jax.experimental.pallas import tpu as pltpu

_LANE_WIDTHS = (4096, 2048, 1024, 512, 256, 128)   # candidate lane-dense widths
_DEFAULT_BLOCK_BYTES = 2 * 1024 * 1024             # ~2 MiB / buffer (v5e, v6e)
_V7X_BLOCK_BYTES = 4 * 1024 * 1024                 # ~4 MiB / buffer (v7x)
_WHOLE_ARRAY_MAX_BYTES = 2 * 1024 * 1024           # small-ragged single-block cap
_VMEM_LIMIT_BYTES = 32 * 1024 * 1024               # safe on v5e/v6e/v7x


def _round_up(a, b):
    return ((a + b - 1) // b) * b


def _target_block_bytes():
    """Per-generation block-size target (bigger blocks on v7x's 3.2 TB/s HBM)."""
    try:
        kind = jax.devices()[0].device_kind.lower()
    except Exception:
        return _DEFAULT_BLOCK_BYTES
    if "v7" in kind or "7x" in kind:
        return _V7X_BLOCK_BYTES
    return _DEFAULT_BLOCK_BYTES


def _clip_kernel(minmax_ref, x_ref, o_ref):
    # minmax_ref: SMEM scalar-prefetch ref, shape (2,) = [min, max]
    # Bounds are cast once to the tile dtype -> native bf16 clamp, integer
    # comparison for integer tensors, no-op for f32.
    cmin = minmax_ref[0].astype(x_ref.dtype)
    cmax = minmax_ref[1].astype(x_ref.dtype)
    x = x_ref[...]
    # torch.clamp semantics: lower bound applied first, then the upper bound,
    # so the upper bound wins when clip_value_min > clip_value_max.
    o_ref[...] = jnp.minimum(jnp.maximum(x, cmin), cmax).astype(o_ref.dtype)


def clip(inputs, clip_value_min, clip_value_max):
    """Elementwise clamp implemented as a Pallas TPU kernel.

    out = min(max(inputs, clip_value_min), clip_value_max)
    """
    orig_shape = inputs.shape
    orig_dtype = inputs.dtype
    n = int(inputs.size)
    if n == 0:
        return inputs

    itemsize = jnp.dtype(orig_dtype).itemsize
    is_int = jnp.issubdtype(orig_dtype, jnp.integer)
    bound_dtype = jnp.int32 if is_int else jnp.float32
    minmax = jnp.stack([
        jnp.asarray(clip_value_min, dtype=bound_dtype).reshape(()),
        jnp.asarray(clip_value_max, dtype=bound_dtype).reshape(()),
    ])

    if inputs.ndim == 0:
        # Scalar input: a kernel launch is pure overhead.
        lo = minmax[0].astype(orig_dtype)
        hi = minmax[1].astype(orig_dtype)
        return jnp.minimum(jnp.maximum(inputs, lo), hi)

    cost = pl.CostEstimate(flops=2 * n, transcendentals=0,
                           bytes_accessed=2 * n * itemsize)

    def run_tiled(x2d, rows, width):
        # Sublane multiple for the native dtype: 8 (f32), 16 (bf16), 32 (i8/fp8).
        sublane_mult = 8 * max(1, 4 // itemsize)
        rows_per_block = max(
            sublane_mult,
            (_target_block_bytes() // (width * itemsize))
            // sublane_mult * sublane_mult,
        )
        tile_rows = min(rows, rows_per_block)
        grid = (pl.cdiv(rows, tile_rows),)
        return pl.pallas_call(
            _clip_kernel,
            out_shape=jax.ShapeDtypeStruct((rows, width), orig_dtype),
            grid_spec=pltpu.PrefetchScalarGridSpec(
                num_scalar_prefetch=1,
                grid=grid,
                in_specs=[pl.BlockSpec((tile_rows, width), lambda i, mm: (i, 0))],
                out_specs=pl.BlockSpec((tile_rows, width), lambda i, mm: (i, 0)),
            ),
            compiler_params=pltpu.CompilerParams(
                dimension_semantics=("parallel",),
                vmem_limit_bytes=_VMEM_LIMIT_BYTES,
            ),
            cost_estimate=cost,
        )(minmax, x2d)

    if n % 128 == 0:
        # Fast path: lane-dense 2D slab, no copies.
        width = next(w for w in _LANE_WIDTHS if n % w == 0)
        rows = n // width
        out2d = run_tiled(inputs.reshape(rows, width), rows, width)
        return out2d.reshape(orig_shape)

    # ---- Ragged element count (n % 128 != 0): no jnp.pad / output slice. ----
    # Estimate the padded VMEM footprint of the original shape as one block.
    lanes = _round_up(orig_shape[-1], 128)
    sub = orig_shape[-2] if len(orig_shape) >= 2 else 1
    sub_p = _round_up(sub, 8 * max(1, 4 // itemsize))
    lead = 1
    for d in orig_shape[:-2]:
        lead *= d
    padded_bytes = lead * sub_p * lanes * itemsize

    if padded_bytes <= _WHOLE_ARRAY_MAX_BYTES:
        # Small ragged array: single whole-array block (full dims satisfy the
        # (8,128) rule), zero extra HBM traffic.
        ndim = len(orig_shape)
        idx_map = lambda i, mm: (0,) * ndim
        return pl.pallas_call(
            _clip_kernel,
            out_shape=jax.ShapeDtypeStruct(orig_shape, orig_dtype),
            grid_spec=pltpu.PrefetchScalarGridSpec(
                num_scalar_prefetch=1,
                grid=(1,),
                in_specs=[pl.BlockSpec(orig_shape, idx_map)],
                out_specs=pl.BlockSpec(orig_shape, idx_map),
            ),
            compiler_params=pltpu.CompilerParams(
                dimension_semantics=("arbitrary",),
                vmem_limit_bytes=_VMEM_LIMIT_BYTES,
            ),
            cost_estimate=cost,
        )(minmax, inputs)

    # Large ragged array: stream the 128-aligned bulk through the kernel and
    # clamp the <=127-element tail with plain jnp (no full-array pad/slice).
    flat = inputs.reshape(-1)
    width = 128
    rows = n // width
    bulk = rows * width
    out_bulk = run_tiled(flat[:bulk].reshape(rows, width), rows, width)
    lo = minmax[0].astype(orig_dtype)
    hi = minmax[1].astype(orig_dtype)
    tail = jnp.minimum(jnp.maximum(flat[bulk:], lo), hi)
    out = jnp.concatenate([out_bulk.reshape(-1), tail])
    return out.reshape(orig_shape)


class Clip:
    """JAX/Pallas port of modelopt Clip module.

    If learn_min / learn_max are True the bounds are held as (trainable) jnp
    scalar arrays; otherwise they stay plain Python numbers.  Forward is the
    same either way: elementwise clamp via the Pallas kernel.
    """

    def __init__(self, clip_value_min, clip_value_max,
                 learn_min=False, learn_max=False):
        if learn_min:
            self.clip_value_min = jnp.asarray(clip_value_min, dtype=jnp.float32)
        else:
            self.clip_value_min = clip_value_min
        if learn_max:
            self.clip_value_max = jnp.asarray(clip_value_max, dtype=jnp.float32)
        else:
            self.clip_value_max = clip_value_max

    def __call__(self, inputs):
        return clip(inputs, self.clip_value_min, self.clip_value_max)


if __name__ == "__main__":
    key = jax.random.PRNGKey(0)

    # 1) NCHW activation-like input (128-aligned fast path), learnable bounds.
    x = jax.random.normal(key, (2, 4, 16, 16), dtype=jnp.float32) * 3.0
    module = Clip(clip_value_min=-1.0, clip_value_max=1.0,
                  learn_min=True, learn_max=True)
    out = jax.block_until_ready(module(x))
    ref = jnp.minimum(jnp.maximum(x, -1.0), 1.0)
    assert out.shape == x.shape and out.dtype == x.dtype
    assert jnp.allclose(out, ref), "mismatch vs reference clamp (aligned path)"

    # 2) Ragged-size input (whole-array single-block path), static bounds.
    y = jax.random.normal(jax.random.PRNGKey(1), (3, 5, 7), dtype=jnp.float32) * 2.0
    module2 = Clip(clip_value_min=-0.5, clip_value_max=0.75)
    out2 = jax.block_until_ready(module2(y))
    ref2 = jnp.minimum(jnp.maximum(y, -0.5), 0.75)
    assert out2.shape == y.shape and out2.dtype == y.dtype
    assert jnp.allclose(out2, ref2), "mismatch vs reference clamp (ragged path)"

    # 3) bf16 input: exercises the native-dtype clamp (no f32 round-trip).
    xb = (jax.random.normal(jax.random.PRNGKey(2), (8, 256), dtype=jnp.float32)
          * 3.0).astype(jnp.bfloat16)
    module3 = Clip(clip_value_min=-1.0, clip_value_max=1.0)
    out3 = jax.block_until_ready(module3(xb))
    ref3 = jnp.minimum(jnp.maximum(xb, jnp.bfloat16(-1.0)), jnp.bfloat16(1.0))
    assert out3.shape == xb.shape and out3.dtype == xb.dtype
    assert jnp.allclose(out3.astype(jnp.float32), ref3.astype(jnp.float32)), \
        "mismatch vs reference clamp (bf16 path)"

    print("KERNEL_OK")
</pallas_src>

<mosaic_0001>
module attributes {stable_mosaic.version = 11 : i64} {
  func.func @_clip_kernel(%arg0: i32, %arg1: memref<2xf32, #tpu.memory_space<smem>>, %arg2: memref<1x2048xf32, #tpu.memory_space<vmem>>, %arg3: memref<1x2048xf32, #tpu.memory_space<vmem>>) attributes {dimension_semantics = [#tpu.dimension_semantics<parallel>], iteration_bounds = array<i64: 1>, scalar_prefetch = 1 : i64, scratch_operands = 0 : i64, tpu.core_type = #tpu.core_type<tc>, window_params = [{transform_indices = @transform_0, window_bounds = array<i64: 1, 2048>}, {transform_indices = @transform_1, window_bounds = array<i64: 1, 2048>}]} {
    %c0 = arith.constant 0 : index
    %0 = memref.load %arg1[%c0] : memref<2xf32, #tpu.memory_space<smem>>
    %c1 = arith.constant 1 : index
    %1 = memref.load %arg1[%c1] : memref<2xf32, #tpu.memory_space<smem>>
    %c0_0 = arith.constant 0 : index
    %c0_1 = arith.constant 0 : index
    %2 = vector.load %arg2[%c0_0, %c0_1] : memref<1x2048xf32, #tpu.memory_space<vmem>>, vector<1x2048xf32>
    %3 = vector.broadcast %0 : f32 to vector<1x2048xf32>
    %4 = arith.maximumf %2, %3 : vector<1x2048xf32>
    %5 = vector.broadcast %1 : f32 to vector<1x2048xf32>
    %6 = arith.minimumf %4, %5 : vector<1x2048xf32>
    %c0_2 = arith.constant 0 : index
    %c0_3 = arith.constant 0 : index
    %7 = vector.load %arg3[%c0_2, %c0_3] : memref<1x2048xf32, #tpu.memory_space<vmem>>, vector<1x2048xf32>
    tpu.vector_store %arg3[%c0_2, %c0_3], %6 {strides = array<i32>} : memref<1x2048xf32, #tpu.memory_space<vmem>>, vector<1x2048xf32>,
    return
  }
  func.func @transform_0(%arg0: i32, %arg1: memref<2xf32, #tpu.memory_space<smem>>) -> (i32, i32) {
    %c0_i32 = arith.constant 0 : i32
    %c0_i32_0 = arith.constant 0 : i32
    return %arg0, %c0_i32 : i32, i32
  }
  func.func @transform_1(%arg0: i32, %arg1: memref<2xf32, #tpu.memory_space<smem>>) -> (i32, i32) {
    %c0_i32 = arith.constant 0 : i32
    %c0_i32_0 = arith.constant 0 : i32
    return %arg0, %c0_i32 : i32, i32
  }
}

</mosaic_0001>

<llo_original>
// kernel: tpu_custom_call.1
$region0: #{tpu_custom_call.1}
  #allocation0 [shape = 'u32[]', space=smem, size = 0x4, offset = 0x4, fixed_abs, tag = 'smem constant byte address 0x4 - core index']
  #allocation1 [shape = 'u32[144,128]{1,0:T(1,128)}', space=vmem, size = 0x12000, scoped, tag = 'internal scratch']
  #allocation2 [shape = 's32[1]{0}', space=sflag, size = 0x4, scoped, tag = 'scoped memory for tpu_custom_call.1']
  #allocation3 [shape = 'u8[512]{0}', space=smem, size = 0x200, scoped, tag = 'prefetched SMEM operand 0']
  %s0 = inlined_call_operand.hbm [shape: f32[2], index: 0, kind: input, shape index: {}]
  %s1 = inlined_call_operand.hbm [shape: f32[1,2048], index: 1, kind: input, shape index: {}]
  %s2 = inlined_call_operand.hbm [shape: f32[1,2048], index: 2, kind: output, shape index: {}]
  %s3 = sld [smem:[#allocation0]]
  $region18: #{tpu_custom_call.1} parent=0
    _
  %s5 = ssub.s32 1, %s3
  %s6 = scalar_select 0, %s5, %s3
  %8 = dma.hbm_to_smem %s0, 16, [#allocation3], [#allocation2]
  %9 = dma.done [#allocation2], 16
  %10 = sfence
  $region1: #{tpu_custom_call.1} parent=0
    #allocation4 [shape = 'u8[8192]{0}', space=vmem, size = 0x2000, scoped, tag = 'input window, operand 1, single buffered']
    #allocation5 [shape = 's32[1]{0}', space=sflag, size = 0x4, scoped, tag = 'scoped memory for tpu_custom_call.1']
    #allocation6 [shape = 's32[1]{0}', space=sflag, size = 0x4, scoped, tag = 'scoped memory for tpu_custom_call.1']
    #allocation7 [shape = 'u8[8192]{0}', space=vmem, size = 0x2000, scoped, tag = 'output window, operand 0, single buffered']
    %11 = vsyncpa [#allocation5], 0
    %12 = vsyncpa [#allocation6], 0
    // Predicated region
    $region2: #{tpu_custom_call.1} parent=1 // pred_check
      _
    $region3: #{tpu_custom_call.1} parent=1 // pred_check_branch
      %14 = sbr.rel (0) target = $region5
    $region4: #{tpu_custom_call.1} parent=1 // pred_region
      %s16 = ssub.s32 256, 256
      %17 = vsyncadd [#allocation5], %s16
      %s19 = sshll.u32 [#allocation4], 4
      %s20 = int_to_ptr.vmem [resolvable:$true] %s19
      %22 = dma.hbm_to_vmem [thread:$0]  %s1, 256, %s20, [#allocation5]
    $region5: #{tpu_custom_call.1} parent=1 // pred_fallthru
      _
    // Predicated region
    $region6: #{tpu_custom_call.1} parent=1 // pred_check
      _
    $region7: #{tpu_custom_call.1} parent=1 // pred_check_branch
      %24 = sbr.rel (0) target = $region9
    $region8: #{tpu_custom_call.1} parent=1 // pred_region
      %25 = dma.done [#allocation5], 256
    $region9: #{tpu_custom_call.1} parent=1 // pred_fallthru
      _
    %s26 = sld [smem:[#allocation3]]
    %s27 = sld [smem:[#allocation3 + $0x1]]
    %v28 = vld [vmem:[#allocation4] sm:$0xff]
    %v29 = vld [vmem:[#allocation4 + $0x8] sm:$0xff]
    %v30 = vstv %s26
    %v31 = vmax.f32 %v28, %v30
    %v32 = vmax.f32 %v29, %v30
    %v33 = vstv %s27
    %v34 = vmin.f32 %v31, %v33
    %v35 = vmin.f32 %v32, %v33
    %36 = vst [vmem:[#allocation7] sm:$0xff] %v34
    %37 = vst [vmem:[#allocation7 + $0x8] sm:$0xff] %v35
    // Predicated region
    $region10: #{tpu_custom_call.1} parent=1 // pred_check
      _
    $region11: #{tpu_custom_call.1} parent=1 // pred_check_branch
      %39 = sbr.rel (0) target = $region13
    $region12: #{tpu_custom_call.1} parent=1 // pred_region
      %s41 = ssub.s32 256, 256
      %42 = vsyncadd [#allocation6], %s41
      %s44 = sshll.u32 [#allocation7], 4
      %s45 = int_to_ptr.vmem [resolvable:$true] %s44
      %47 = dma.vmem_to_hbm [thread:$0]  %s45, 256, %s2, [#allocation6]
    $region13: #{tpu_custom_call.1} parent=1 // pred_fallthru
      _
    // Predicated region
    $region14: #{tpu_custom_call.1} parent=1 // pred_check
      _
    $region15: #{tpu_custom_call.1} parent=1 // pred_check_branch
      %49 = sbr.rel (0) target = $region17
    $region16: #{tpu_custom_call.1} parent=1 // pred_region
      %50 = dma.done [#allocation6], 256
    $region17: #{tpu_custom_call.1} parent=1 // pred_fallthru
      _
    %51 = vsyncpa [#allocation5], 1
    %52 = vsyncpa [#allocation6], 1

</llo_original>
